<compile_context>
chip_gen: v5e
topology: v5e:2x2
jax: 0.10.0
libtpu: 0.0.40
codegen_flags: <defaults>
</compile_context>

<pallas_src>
import jax
import jax.numpy as jnp
import numpy as np
from jax.experimental import pallas as pl
from jax.experimental.pallas import tpu as pltpu


# ---------------------------------------------------------------------------
# Fused kernel: conv1x1 (surviving batch/channel only) + Linear, pure VPU.
# ---------------------------------------------------------------------------
def fused_kernel(x_ref, p_ref, out_ref):
    # x_ref  : [N, Cin, H, W] = [2, 2, 2, 2] full input in VMEM
    # p_ref  : [9] f32 SMEM scalars:
    #          p[0:2] = conv_w[1, :, 0, 0]      p[2]   = conv_b[1]
    #          p[3:7] = lin_w row-major [out, in]   p[7:9] = lin_b
    # out_ref: [H, out_features] = [2, 2]
    #
    # Static fold of the integer path: (shape // shape)[0] == 1, so only
    # batch 1 / conv out-channel 1 survive the slicing. (Assumes the module's
    # fixed [2,2,2,2] shapes — same implicit assumption as the PyTorch code.)

    # conv1 restricted to output-channel 1:  y = sum_c x[1, c] * w[1, c] + b[1]
    y = x_ref[1, 0] * p_ref[0] + x_ref[1, 1] * p_ref[1] + p_ref[2]    # [H, W]
    # (`y * ones([1,1])` in the original model is a broadcast multiply by 1.0 — no-op.)

    # Linear(2, 2): z[:, o] = y[:, 0]*W[o, 0] + y[:, 1]*W[o, 1] + b[o]
    y0 = y[:, 0:1]                                                    # [H, 1]
    y1 = y[:, 1:2]                                                    # [H, 1]
    out_ref[:, 0:1] = y0 * p_ref[3] + y1 * p_ref[4] + p_ref[7]        # feature 0
    out_ref[:, 1:2] = y0 * p_ref[5] + y1 * p_ref[6] + p_ref[8]        # feature 1


# ---------------------------------------------------------------------------
# Parameter packing — do this ONCE per set of weights, outside the hot path.
# ---------------------------------------------------------------------------
def pack_params(conv_w, conv_b, lin_w, lin_b):
    """Pack the 9 scalars the kernel needs into one f32[9] SMEM vector."""
    idx = 1  # static fold of (shape // shape)[0]
    return jnp.concatenate([
        conv_w[idx, :, 0, 0],      # 2: conv weights for out-channel idx
        conv_b[idx:idx + 1],       # 1: conv bias for out-channel idx
        lin_w.reshape(-1),         # 4: Linear weight, row-major [out, in]
        lin_b,                     # 2: Linear bias
    ]).astype(jnp.float32)


# ---------------------------------------------------------------------------
# Wrappers
# ---------------------------------------------------------------------------
def model_forward_packed(x, params):
    """Hot path: x NCHW [2,2,2,2] f32, params f32[9] (from pack_params)."""
    N, C, H, W = x.shape
    out_features = 2
    return pl.pallas_call(
        fused_kernel,
        out_shape=jax.ShapeDtypeStruct((H, out_features), jnp.float32),
        in_specs=[
            pl.BlockSpec(memory_space=pltpu.MemorySpace.VMEM),   # full x tile
            pl.BlockSpec(memory_space=pltpu.MemorySpace.SMEM),   # scalar params
        ],
        out_specs=pl.BlockSpec(memory_space=pltpu.MemorySpace.VMEM),
        cost_estimate=pl.CostEstimate(flops=24, transcendentals=0,
                                      bytes_accessed=160),
    )(x, params)


def model_forward(x, conv_w, conv_b, lin_w, lin_b):
    """Convenience wrapper matching the module signature (packs params inline)."""
    return model_forward_packed(x, pack_params(conv_w, conv_b, lin_w, lin_b))


def model_forward_ref(x, conv_w, conv_b, lin_w, lin_b):
    """Pure-JAX reference mirroring the PyTorch forward (full conv + slice)."""
    conv = jnp.einsum("nchw,oc->nohw", x, conv_w[:, :, 0, 0])
    conv = conv + conv_b[None, :, None, None]
    idx = 1                                         # == (shape // shape)[0]
    y = conv[idx, idx] * jnp.ones((1, 1), jnp.float32)
    return y @ lin_w.T + lin_b


# ---------------------------------------------------------------------------
if __name__ == "__main__":
    key = jax.random.PRNGKey(0)
    k1, k2, k3, k4, k5 = jax.random.split(key, 5)

    # Parameter shapes from the module's __init__.
    conv_w = 0.5 * jax.random.normal(k1, (2, 2, 1, 1), jnp.float32)   # [Cout, Cin, 1, 1]
    conv_b = 0.5 * jax.random.normal(k2, (2,), jnp.float32)
    lin_w = 0.5 * jax.random.normal(k3, (2, 2), jnp.float32)          # [out, in]
    lin_b = 0.5 * jax.random.normal(k4, (2,), jnp.float32)

    # INPUT_SHAPE = [2, 2, 2, 2] (NCHW)
    x = jax.random.normal(k5, (2, 2, 2, 2), jnp.float32)

    # Pack weights once, outside the per-call hot path.
    params = jax.block_until_ready(pack_params(conv_w, conv_b, lin_w, lin_b))

    fwd = jax.jit(model_forward_packed)
    z = fwd(x, params)
    jax.block_until_ready(z)

    z_ref = model_forward_ref(x, conv_w, conv_b, lin_w, lin_b)
    assert z.shape == (2, 2), z.shape
    np.testing.assert_allclose(np.asarray(z), np.asarray(z_ref), rtol=1e-5, atol=1e-5)

    print("KERNEL_OK")
</pallas_src>

<mosaic_0001>
module attributes {stable_mosaic.version = 11 : i64} {
  func.func @fused_kernel(%arg0: memref<2x2x2x2xf32, #tpu.memory_space<vmem>>, %arg1: memref<9xf32, #tpu.memory_space<smem>>, %arg2: memref<2x2xf32, #tpu.memory_space<vmem>>) attributes {dimension_semantics = [], scalar_prefetch = 0 : i64, scratch_operands = 0 : i64, tpu.core_type = #tpu.core_type<tc>} {
    %c1 = arith.constant 1 : index
    %c0 = arith.constant 0 : index
    %c0_0 = arith.constant 0 : index
    %c0_1 = arith.constant 0 : index
    %0 = vector.load %arg0[%c1, %c0, %c0_0, %c0_1] : memref<2x2x2x2xf32, #tpu.memory_space<vmem>>, vector<1x1x2x2xf32>
    %1 = vector.shape_cast %0 : vector<1x1x2x2xf32> to vector<2x2xf32>
    %c0_2 = arith.constant 0 : index
    %2 = memref.load %arg1[%c0_2] : memref<9xf32, #tpu.memory_space<smem>>
    %3 = vector.broadcast %2 : f32 to vector<2x2xf32>
    %4 = arith.mulf %1, %3 : vector<2x2xf32>
    %c1_3 = arith.constant 1 : index
    %c1_4 = arith.constant 1 : index
    %c0_5 = arith.constant 0 : index
    %c0_6 = arith.constant 0 : index
    %5 = vector.load %arg0[%c1_3, %c1_4, %c0_5, %c0_6] : memref<2x2x2x2xf32, #tpu.memory_space<vmem>>, vector<1x1x2x2xf32>
    %6 = vector.shape_cast %5 : vector<1x1x2x2xf32> to vector<2x2xf32>
    %c1_7 = arith.constant 1 : index
    %7 = memref.load %arg1[%c1_7] : memref<9xf32, #tpu.memory_space<smem>>
    %8 = vector.broadcast %7 : f32 to vector<2x2xf32>
    %9 = arith.mulf %6, %8 : vector<2x2xf32>
    %10 = arith.addf %4, %9 : vector<2x2xf32>
    %c2 = arith.constant 2 : index
    %11 = memref.load %arg1[%c2] : memref<9xf32, #tpu.memory_space<smem>>
    %12 = vector.broadcast %11 : f32 to vector<2x2xf32>
    %13 = arith.addf %10, %12 : vector<2x2xf32>
    %14 = vector.extract_strided_slice %13 {offsets = [0, 0], sizes = [2, 1], strides = [1, 1]} : vector<2x2xf32> to vector<2x1xf32>
    %15 = vector.extract_strided_slice %13 {offsets = [0, 1], sizes = [2, 1], strides = [1, 1]} : vector<2x2xf32> to vector<2x1xf32>
    %c3 = arith.constant 3 : index
    %16 = memref.load %arg1[%c3] : memref<9xf32, #tpu.memory_space<smem>>
    %17 = vector.broadcast %16 : f32 to vector<2x1xf32>
    %18 = arith.mulf %14, %17 : vector<2x1xf32>
    %c4 = arith.constant 4 : index
    %19 = memref.load %arg1[%c4] : memref<9xf32, #tpu.memory_space<smem>>
    %20 = vector.broadcast %19 : f32 to vector<2x1xf32>
    %21 = arith.mulf %15, %20 : vector<2x1xf32>
    %22 = arith.addf %18, %21 : vector<2x1xf32>
    %c7 = arith.constant 7 : index
    %23 = memref.load %arg1[%c7] : memref<9xf32, #tpu.memory_space<smem>>
    %24 = vector.broadcast %23 : f32 to vector<2x1xf32>
    %25 = arith.addf %22, %24 : vector<2x1xf32>
    %c0_8 = arith.constant 0 : index
    %c0_9 = arith.constant 0 : index
    %26 = vector.load %arg2[%c0_8, %c0_9] : memref<2x2xf32, #tpu.memory_space<vmem>>, vector<2x1xf32>
    tpu.vector_store %arg2[%c0_8, %c0_9], %25 {strides = array<i32>} : memref<2x2xf32, #tpu.memory_space<vmem>>, vector<2x1xf32>,
    %c5 = arith.constant 5 : index
    %27 = memref.load %arg1[%c5] : memref<9xf32, #tpu.memory_space<smem>>
    %28 = vector.broadcast %27 : f32 to vector<2x1xf32>
    %29 = arith.mulf %14, %28 : vector<2x1xf32>
    %c6 = arith.constant 6 : index
    %30 = memref.load %arg1[%c6] : memref<9xf32, #tpu.memory_space<smem>>
    %31 = vector.broadcast %30 : f32 to vector<2x1xf32>
    %32 = arith.mulf %15, %31 : vector<2x1xf32>
    %33 = arith.addf %29, %32 : vector<2x1xf32>
    %c8 = arith.constant 8 : index
    %34 = memref.load %arg1[%c8] : memref<9xf32, #tpu.memory_space<smem>>
    %35 = vector.broadcast %34 : f32 to vector<2x1xf32>
    %36 = arith.addf %33, %35 : vector<2x1xf32>
    %c0_10 = arith.constant 0 : index
    %c1_11 = arith.constant 1 : index
    %37 = vector.load %arg2[%c0_10, %c1_11] : memref<2x2xf32, #tpu.memory_space<vmem>>, vector<2x1xf32>
    tpu.vector_store %arg2[%c0_10, %c1_11], %36 {strides = array<i32>} : memref<2x2xf32, #tpu.memory_space<vmem>>, vector<2x1xf32>,
    return
  }
}

</mosaic_0001>

<llo_original>
// kernel: model_forward_packed.1
$region0: #{model_forward_packed.1}
  #allocation0 [shape = 'u32[]', space=smem, size = 0x4, offset = 0x4, fixed_abs, tag = 'smem constant byte address 0x4 - core index']
  #allocation1 [shape = 'u32[72,128]{1,0:T(1,128)}', space=vmem, size = 0x9000, scoped, tag = 'internal scratch']
  %s0 = inlined_call_operand.hbm [shape: f32[2,2,2,2], index: 0, kind: input, shape index: {}]
  %s1 = inlined_call_operand.hbm [shape: f32[9], index: 1, kind: input, shape index: {}]
  %s2 = inlined_call_operand.hbm [shape: f32[2,2], index: 2, kind: output, shape index: {}]
  %s3 = sld [smem:[#allocation0]]
  $region26: #{model_forward_packed.1} parent=0
    _
  %s5 = ssub.s32 1, %s3
  %s6 = scalar_select 0, %s5, %s3
  $region1: #{model_forward_packed.1} parent=0
    #allocation2 [shape = 'u8[4096]{0}', space=vmem, size = 0x1000, scoped, tag = 'input window, operand 0, single buffered']
    #allocation3 [shape = 's32[1]{0}', space=sflag, size = 0x4, scoped, tag = 'scoped memory for model_forward_packed.1']
    #allocation4 [shape = 's32[1]{0}', space=sflag, size = 0x4, scoped, tag = 'scoped memory for model_forward_packed.1']
    #allocation5 [shape = 's32[1]{0}', space=sflag, size = 0x4, scoped, tag = 'scoped memory for model_forward_packed.1']
    #allocation6 [shape = 'u8[512]{0}', space=smem, size = 0x200, scoped, tag = 'input window, operand 1, single buffered']
    #allocation7 [shape = 'u8[1024]{0}', space=vmem, size = 0x400, scoped, tag = 'output window, operand 0, single buffered']
    %7 = vsyncpa [#allocation3], 0
    %8 = vsyncpa [#allocation5], 0
    %9 = vsyncpa [#allocation4], 0
    // Predicated region
    $region2: #{model_forward_packed.1} parent=1 // pred_check
      _
    $region3: #{model_forward_packed.1} parent=1 // pred_check_branch
      %11 = sbr.rel (0) target = $region5
    $region4: #{model_forward_packed.1} parent=1 // pred_region
      %13 = vsyncadd [#allocation3], 0
      %s14 = sshll.u32 %s0, 4
      %s15 = int_to_ptr.hbm [resolvable:$true] %s14
      %s16 = sshll.u32 [#allocation2], 4
      %s17 = int_to_ptr.vmem [resolvable:$true] %s16
      %22 = dma.hbm_to_vmem [thread:$0]  %s15, 128, %s17, [#allocation3], 32, 32, 2
    $region5: #{model_forward_packed.1} parent=1 // pred_fallthru
      _
    // Predicated region
    $region6: #{model_forward_packed.1} parent=1 // pred_check
      _
    $region7: #{model_forward_packed.1} parent=1 // pred_check_branch
      %24 = sbr.rel (0) target = $region9
    $region8: #{model_forward_packed.1} parent=1 // pred_region
      %26 = vsyncadd [#allocation5], 0
      %s28 = sshll.u32 %s1, 4
      %s29 = int_to_ptr.hbm [resolvable:$true] %s28
      %31 = dma.hbm_to_smem %s29, 16, [#allocation6], [#allocation5]
    $region9: #{model_forward_packed.1} parent=1 // pred_fallthru
      _
    // Predicated region
    $region10: #{model_forward_packed.1} parent=1 // pred_check
      _
    $region11: #{model_forward_packed.1} parent=1 // pred_check_branch
      %33 = sbr.rel (0) target = $region13
    $region12: #{model_forward_packed.1} parent=1 // pred_region
      %35 = dma.done [#allocation3], 128
    $region13: #{model_forward_packed.1} parent=1 // pred_fallthru
      _
    // Predicated region
    $region14: #{model_forward_packed.1} parent=1 // pred_check
      _
    $region15: #{model_forward_packed.1} parent=1 // pred_check_branch
      %37 = sbr.rel (0) target = $region17
    $region16: #{model_forward_packed.1} parent=1 // pred_region
      %39 = dma.done [#allocation5], 16
    $region17: #{model_forward_packed.1} parent=1 // pred_fallthru
      _
    %40 = sfence
    %s41 = scalar_lea.vmem [#allocation2], 4
    %v42 = vld [vmem:[%s41] sm:$0x3]
    %s43 = sld [smem:[#allocation6]]
    %v44 = vstv %s43
    %v45 = vmul.f32 %v42, %v44
    %s46 = scalar_lea.vmem [#allocation2], 6
    %v47 = vld [vmem:[%s46] sm:$0x3]
    %s48 = sld [smem:[#allocation6 + $0x1]]
    %v49 = vstv %s48
    %v50 = vmul.f32 %v47, %v49
    %v51 = vadd.f32 %v45, %v50
    %s52 = sld [smem:[#allocation6 + $0x2]]
    %v53 = vstv %s52
    %v54 = vadd.f32 %v51, %v53
    %s55 = sld [smem:[#allocation6 + $0x3]]
    %v56 = vstv %s55
    %v57 = vmul.f32 %v54, %v56
    %s58 = sld [smem:[#allocation6 + $0x4]]
    %v59 = vstv %s58
    %v60 = vmul.f32 %v54, %v59
    %62 = vrot.lane.b32.xlu0 %v60, 127
    %v63 = vpop.permute.xlu0 %62
    %v65 = vadd.f32 %v57, %v63
    %s66 = sld [smem:[#allocation6 + $0x7]]
    %v67 = vstv %s66
    %v68 = vadd.f32 %v65, %v67
    %vm69 = vcmask 1024
    %70 = vst.msk [vmem:[#allocation7] sm:$0x3] %vm69, %v68
    %s71 = sld [smem:[#allocation6 + $0x5]]
    %v72 = vstv %s71
    %v73 = vmul.f32 %v54, %v72
    %s74 = sld [smem:[#allocation6 + $0x6]]
    %v75 = vstv %s74
    %v76 = vmul.f32 %v54, %v75
    %78 = vrot.lane.b32.xlu0 %v76, 127
    %v79 = vpop.permute.xlu0 %78
    %v81 = vadd.f32 %v73, %v79
    %s82 = sld [smem:[#allocation6 + $0x8]]
    %v83 = vstv %s82
    %v84 = vadd.f32 %v81, %v83
    %86 = vrot.lane.b32.xlu0 %v84, 1
    %v87 = vpop.permute.xlu0 %86
    %vm89 = vcmask 9224
    %90 = vst.msk [vmem:[#allocation7] sm:$0x3] %vm89, %v87
    // Predicated region
    $region18: #{model_forward_packed.1} parent=1 // pred_check
      _
    $region19: #{model_forward_packed.1} parent=1 // pred_check_branch
      %92 = sbr.rel (0) target = $region21
    $region20: #{model_forward_packed.1} parent=1 // pred_region
      %94 = vsyncadd [#allocation4], 0
      %s96 = sshll.u32 [#allocation7], 4
      %s97 = int_to_ptr.vmem [resolvable:$true] %s96
      %s98 = sshll.u32 %s2, 4
      %s99 = int_to_ptr.hbm [resolvable:$true] %s98
      %101 = dma.vmem_to_hbm [thread:$0]  %s97, 32, %s99, [#allocation4]
    $region21: #{model_forward_packed.1} parent=1 // pred_fallthru
      _
    // Predicated region
    $region22: #{model_forward_packed.1} parent=1 // pred_check
      _
    $region23: #{model_forward_packed.1} parent=1 // pred_check_branch
      %103 = sbr.rel (0) target = $region25
    $region24: #{model_forward_packed.1} parent=1 // pred_region
      %105 = dma.done [#allocation4], 32
    $region25: #{model_forward_packed.1} parent=1 // pred_fallthru
      _
    %106 = vsyncpa [#allocation3], 1
    %107 = vsyncpa [#allocation4], 1
    %108 = vsyncpa [#allocation5], 1

</llo_original>
